<compile_context>
chip_gen: v6e
topology: v6e:2x2x1
jax: 0.10.0
libtpu: 0.0.40
codegen_flags: <defaults>
</compile_context>

<pallas_src>
import jax
import jax.numpy as jnp
from jax.experimental import pallas as pl
from jax.experimental.pallas import tpu as pltpu


def _round_up(n, m):
    return ((n + m - 1) // m) * m


def _mlp_kernel(x_ref, w1_ref, b1_ref, w2_ref, b2_ref, w3_ref, b3_ref,
                h2_ref, out_ref):
    # Read biases once (f32), keep all elementwise math on the f32 accumulator.
    b1 = b1_ref[...]
    b2 = b2_ref[...]
    b3 = b3_ref[...]

    # Layer 1: h1 = relu(x @ W1 + b1)   (bf16 matmul, f32 accumulate)
    h1 = jnp.dot(x_ref[...], w1_ref[...], preferred_element_type=jnp.float32)
    h1 = jnp.maximum(h1 + b1, 0.0)

    # Layer 2: h2 = relu(h1 @ W2 + b2)
    h2 = jnp.dot(h1.astype(jnp.bfloat16), w2_ref[...],
                 preferred_element_type=jnp.float32)
    h2 = jnp.maximum(h2 + b2, 0.0)
    h2_ref[...] = h2.astype(h2_ref.dtype)

    # Layer 3: out = h2 @ W3 + b3   (no activation)
    out = jnp.dot(h2.astype(jnp.bfloat16), w3_ref[...],
                  preferred_element_type=jnp.float32)
    out_ref[...] = (out + b3).astype(out_ref.dtype)


def _vmem_budget_bytes(tb, dp, hp, op):
    w_bytes = (dp * hp + hp * hp + hp * op) * 2        # bf16 weights (resident)
    b_bytes = (hp + hp + op) * 4                       # f32 biases
    io_bytes = tb * (dp * 2 + hp * 4 + op * 4)         # x (bf16) + h2/out (f32) tiles
    tmp_bytes = tb * hp * 4 * 4                        # f32 temporaries headroom
    total = 2 * (w_bytes + b_bytes + io_bytes) + tmp_bytes + (4 << 20)
    return int(min(total, 100 * 1024 * 1024))


def mlp_forward(x, params, *, block_batch=None):
    """x: [B, input_dim] float32. Returns (h2, output) like the PyTorch module."""
    w1, b1, w2, b2, w3, b3 = params
    B, input_dim = x.shape
    hidden_dim = w1.shape[1]
    output_dim = w3.shape[1]

    # Lane-align feature dims; sublane-align / tile the batch dim.
    dp = _round_up(input_dim, 128)
    hp = _round_up(hidden_dim, 128)
    op = _round_up(output_dim, 128)

    if block_batch is None:
        tb = min(512, max(8, _round_up(B, 8)))     # batch tile (multiple of 8)
    else:
        tb = _round_up(block_batch, 8)
    bp = _round_up(B, tb)

    # Zero-pad (padding rows/cols of zero weights keep the math exact) and
    # cast matmul operands to bf16; biases stay f32 (added on the accumulator).
    xp = jnp.zeros((bp, dp), jnp.bfloat16).at[:B, :input_dim].set(
        x.astype(jnp.bfloat16))

    def pad_w(w, r, c):
        return jnp.zeros((r, c), jnp.bfloat16).at[:w.shape[0], :w.shape[1]].set(
            w.astype(jnp.bfloat16))

    def pad_b(b, c):
        return jnp.zeros((1, c), jnp.float32).at[:, :b.shape[1]].set(
            b.astype(jnp.float32))

    w1p, b1p = pad_w(w1, dp, hp), pad_b(b1, hp)
    w2p, b2p = pad_w(w2, hp, hp), pad_b(b2, hp)
    w3p, b3p = pad_w(w3, hp, op), pad_b(b3, op)

    grid = (bp // tb,)
    resident = lambda shape: pl.BlockSpec(shape, lambda i: (0,) * len(shape))
    batched = lambda shape: pl.BlockSpec(shape, lambda i: (i, 0))

    h2_pad, out_pad = pl.pallas_call(
        _mlp_kernel,
        out_shape=(
            jax.ShapeDtypeStruct((bp, hp), jnp.float32),
            jax.ShapeDtypeStruct((bp, op), jnp.float32),
        ),
        grid=grid,
        in_specs=[
            batched((tb, dp)),                     # x tile (pipelined over batch)
            resident((dp, hp)), resident((1, hp)), # W1, b1 (VMEM-resident)
            resident((hp, hp)), resident((1, hp)), # W2, b2
            resident((hp, op)), resident((1, op)), # W3, b3
        ],
        out_specs=(
            batched((tb, hp)),                     # h2 tile
            batched((tb, op)),                     # out tile
        ),
        compiler_params=pltpu.CompilerParams(
            dimension_semantics=("parallel",),     # shard batch tiles across TCs (v7x)
            vmem_limit_bytes=_vmem_budget_bytes(tb, dp, hp, op),
        ),
    )(xp, w1p, b1p, w2p, b2p, w3p, b3p)

    # Strip padding.
    return h2_pad[:B, :hidden_dim], out_pad[:B, :output_dim]


def init_mlp_params(key, input_dim, hidden_dim, output_dim):
    """Deterministic init mimicking nn.Linear's uniform(-1/sqrt(fan_in), 1/sqrt(fan_in))."""
    keys = jax.random.split(key, 6)

    def linear(kw, kb, fan_in, fan_out):
        bound = 1.0 / jnp.sqrt(fan_in)
        w = jax.random.uniform(kw, (fan_in, fan_out), jnp.float32, -bound, bound)
        b = jax.random.uniform(kb, (1, fan_out), jnp.float32, -bound, bound)
        return w, b

    w1, b1 = linear(keys[0], keys[1], input_dim, hidden_dim)
    w2, b2 = linear(keys[2], keys[3], hidden_dim, hidden_dim)
    w3, b3 = linear(keys[4], keys[5], hidden_dim, output_dim)
    return (w1, b1, w2, b2, w3, b3)


if __name__ == "__main__":
    key = jax.random.PRNGKey(0)
    k_x, k_p = jax.random.split(key)

    batch, input_dim, hidden_dim, output_dim = 8, 16, 32, 8
    x = jax.random.normal(k_x, (batch, input_dim), jnp.float32)
    params = init_mlp_params(k_p, input_dim, hidden_dim, output_dim)

    h2, out = mlp_forward(x, params)
    jax.block_until_ready((h2, out))

    # Pure-JAX f32 reference (same math as the PyTorch module).  Tolerances are
    # loosened because matmul inputs are bf16 (accumulation stays f32).
    w1, b1, w2, b2, w3, b3 = params
    h1_ref = jnp.maximum(x @ w1 + b1, 0.0)
    h2_ref = jnp.maximum(h1_ref @ w2 + b2, 0.0)
    out_ref = h2_ref @ w3 + b3

    assert h2.shape == (batch, hidden_dim) and out.shape == (batch, output_dim)
    assert jnp.allclose(h2, h2_ref, atol=2e-2, rtol=2e-2)
    assert jnp.allclose(out, out_ref, atol=2e-2, rtol=2e-2)
    print("KERNEL_OK")
</pallas_src>

<mosaic_0001>
module attributes {stable_mosaic.version = 11 : i64} {
  func.func @_mlp_kernel(%arg0: i32, %arg1: memref<8x128xbf16, #tpu.memory_space<vmem>>, %arg2: memref<128x128xbf16, #tpu.memory_space<vmem>>, %arg3: memref<1x128xf32, #tpu.memory_space<vmem>>, %arg4: memref<128x128xbf16, #tpu.memory_space<vmem>>, %arg5: memref<1x128xf32, #tpu.memory_space<vmem>>, %arg6: memref<128x128xbf16, #tpu.memory_space<vmem>>, %arg7: memref<1x128xf32, #tpu.memory_space<vmem>>, %arg8: memref<8x128xf32, #tpu.memory_space<vmem>>, %arg9: memref<8x128xf32, #tpu.memory_space<vmem>>) attributes {dimension_semantics = [#tpu.dimension_semantics<parallel>], iteration_bounds = array<i64: 1>, scalar_prefetch = 0 : i64, scratch_operands = 0 : i64, tpu.core_type = #tpu.core_type<tc>, window_params = [{transform_indices = @transform_0, window_bounds = array<i64: 8, 128>}, {pipeline_mode = #tpu.pipeline_mode<synchronous>, transform_indices = @transform_1, window_bounds = array<i64: 128, 128>}, {pipeline_mode = #tpu.pipeline_mode<synchronous>, transform_indices = @transform_2, window_bounds = array<i64: 1, 128>}, {pipeline_mode = #tpu.pipeline_mode<synchronous>, transform_indices = @transform_3, window_bounds = array<i64: 128, 128>}, {pipeline_mode = #tpu.pipeline_mode<synchronous>, transform_indices = @transform_4, window_bounds = array<i64: 1, 128>}, {pipeline_mode = #tpu.pipeline_mode<synchronous>, transform_indices = @transform_5, window_bounds = array<i64: 128, 128>}, {pipeline_mode = #tpu.pipeline_mode<synchronous>, transform_indices = @transform_6, window_bounds = array<i64: 1, 128>}, {transform_indices = @transform_7, window_bounds = array<i64: 8, 128>}, {transform_indices = @transform_8, window_bounds = array<i64: 8, 128>}]} {
    %c0 = arith.constant 0 : index
    %c0_0 = arith.constant 0 : index
    %0 = vector.load %arg3[%c0, %c0_0] : memref<1x128xf32, #tpu.memory_space<vmem>>, vector<1x128xf32>
    %c0_1 = arith.constant 0 : index
    %c0_2 = arith.constant 0 : index
    %1 = vector.load %arg5[%c0_1, %c0_2] : memref<1x128xf32, #tpu.memory_space<vmem>>, vector<1x128xf32>
    %c0_3 = arith.constant 0 : index
    %c0_4 = arith.constant 0 : index
    %2 = vector.load %arg7[%c0_3, %c0_4] : memref<1x128xf32, #tpu.memory_space<vmem>>, vector<1x128xf32>
    %c0_5 = arith.constant 0 : index
    %c0_6 = arith.constant 0 : index
    %3 = vector.load %arg1[%c0_5, %c0_6] : memref<8x128xbf16, #tpu.memory_space<vmem>>, vector<8x128xbf16>
    %c0_7 = arith.constant 0 : index
    %c0_8 = arith.constant 0 : index
    %4 = vector.load %arg2[%c0_7, %c0_8] : memref<128x128xbf16, #tpu.memory_space<vmem>>, vector<128x128xbf16>
    %cst = arith.constant dense<0.000000e+00> : vector<8x128xf32>
    %5 = tpu.matmul %3, %4, %cst {dimension_numbers = #tpu.dot_dimension_numbers<[1], [0], [0], [1], [0, 0, 1, 1], [], []>} : vector<8x128xbf16>, vector<128x128xbf16>, vector<8x128xf32> -> vector<8x128xf32>
    %6 = vector.broadcast %0 : vector<1x128xf32> to vector<8x128xf32>
    %7 = arith.addf %5, %6 : vector<8x128xf32>
    %cst_9 = arith.constant 0.000000e+00 : f32
    %8 = vector.broadcast %cst_9 : f32 to vector<8x128xf32>
    %9 = arith.maximumf %7, %8 : vector<8x128xf32>
    %10 = arith.truncf %9 : vector<8x128xf32> to vector<8x128xbf16>
    %c0_10 = arith.constant 0 : index
    %c0_11 = arith.constant 0 : index
    %11 = vector.load %arg4[%c0_10, %c0_11] : memref<128x128xbf16, #tpu.memory_space<vmem>>, vector<128x128xbf16>
    %cst_12 = arith.constant dense<0.000000e+00> : vector<8x128xf32>
    %12 = tpu.matmul %10, %11, %cst_12 {dimension_numbers = #tpu.dot_dimension_numbers<[1], [0], [0], [1], [0, 0, 1, 1], [], []>} : vector<8x128xbf16>, vector<128x128xbf16>, vector<8x128xf32> -> vector<8x128xf32>
    %13 = vector.broadcast %1 : vector<1x128xf32> to vector<8x128xf32>
    %14 = arith.addf %12, %13 : vector<8x128xf32>
    %cst_13 = arith.constant 0.000000e+00 : f32
    %15 = vector.broadcast %cst_13 : f32 to vector<8x128xf32>
    %16 = arith.maximumf %14, %15 : vector<8x128xf32>
    %c0_14 = arith.constant 0 : index
    %c0_15 = arith.constant 0 : index
    %17 = vector.load %arg8[%c0_14, %c0_15] : memref<8x128xf32, #tpu.memory_space<vmem>>, vector<8x128xf32>
    tpu.vector_store %arg8[%c0_14, %c0_15], %16 {strides = array<i32>} : memref<8x128xf32, #tpu.memory_space<vmem>>, vector<8x128xf32>,
    %18 = arith.truncf %16 : vector<8x128xf32> to vector<8x128xbf16>
    %c0_16 = arith.constant 0 : index
    %c0_17 = arith.constant 0 : index
    %19 = vector.load %arg6[%c0_16, %c0_17] : memref<128x128xbf16, #tpu.memory_space<vmem>>, vector<128x128xbf16>
    %cst_18 = arith.constant dense<0.000000e+00> : vector<8x128xf32>
    %20 = tpu.matmul %18, %19, %cst_18 {dimension_numbers = #tpu.dot_dimension_numbers<[1], [0], [0], [1], [0, 0, 1, 1], [], []>} : vector<8x128xbf16>, vector<128x128xbf16>, vector<8x128xf32> -> vector<8x128xf32>
    %21 = vector.broadcast %2 : vector<1x128xf32> to vector<8x128xf32>
    %22 = arith.addf %20, %21 : vector<8x128xf32>
    %c0_19 = arith.constant 0 : index
    %c0_20 = arith.constant 0 : index
    %23 = vector.load %arg9[%c0_19, %c0_20] : memref<8x128xf32, #tpu.memory_space<vmem>>, vector<8x128xf32>
    tpu.vector_store %arg9[%c0_19, %c0_20], %22 {strides = array<i32>} : memref<8x128xf32, #tpu.memory_space<vmem>>, vector<8x128xf32>,
    return
  }
  func.func @transform_0(%arg0: i32) -> (i32, i32) {
    %c0_i32 = arith.constant 0 : i32
    %c0_i32_0 = arith.constant 0 : i32
    return %arg0, %c0_i32 : i32, i32
  }
  func.func @transform_1(%arg0: i32) -> (i32, i32) {
    %c0_i32 = arith.constant 0 : i32
    %c0_i32_0 = arith.constant 0 : i32
    %c0_i32_1 = arith.constant 0 : i32
    return %c0_i32, %c0_i32_0 : i32, i32
  }
  func.func @transform_2(%arg0: i32) -> (i32, i32) {
    %c0_i32 = arith.constant 0 : i32
    %c0_i32_0 = arith.constant 0 : i32
    %c0_i32_1 = arith.constant 0 : i32
    return %c0_i32, %c0_i32_0 : i32, i32
  }
  func.func @transform_3(%arg0: i32) -> (i32, i32) {
    %c0_i32 = arith.constant 0 : i32
    %c0_i32_0 = arith.constant 0 : i32
    %c0_i32_1 = arith.constant 0 : i32
    return %c0_i32, %c0_i32_0 : i32, i32
  }
  func.func @transform_4(%arg0: i32) -> (i32, i32) {
    %c0_i32 = arith.constant 0 : i32
    %c0_i32_0 = arith.constant 0 : i32
    %c0_i32_1 = arith.constant 0 : i32
    return %c0_i32, %c0_i32_0 : i32, i32
  }
  func.func @transform_5(%arg0: i32) -> (i32, i32) {
    %c0_i32 = arith.constant 0 : i32
    %c0_i32_0 = arith.constant 0 : i32
    %c0_i32_1 = arith.constant 0 : i32
    return %c0_i32, %c0_i32_0 : i32, i32
  }
  func.func @transform_6(%arg0: i32) -> (i32, i32) {
    %c0_i32 = arith.constant 0 : i32
    %c0_i32_0 = arith.constant 0 : i32
    %c0_i32_1 = arith.constant 0 : i32
    return %c0_i32, %c0_i32_0 : i32, i32
  }
  func.func @transform_7(%arg0: i32) -> (i32, i32) {
    %c0_i32 = arith.constant 0 : i32
    %c0_i32_0 = arith.constant 0 : i32
    return %arg0, %c0_i32 : i32, i32
  }
  func.func @transform_8(%arg0: i32) -> (i32, i32) {
    %c0_i32 = arith.constant 0 : i32
    %c0_i32_0 = arith.constant 0 : i32
    return %arg0, %c0_i32 : i32, i32
  }
}

</mosaic_0001>

<llo_original>
// kernel: tpu_custom_call.1
$region0: #{tpu_custom_call.1}
  #allocation0 [shape = 'u32[]', space=smem, size = 0x4, offset = 0x4, fixed_abs, tag = 'smem constant byte address 0x4 - core index']
  #allocation1 [shape = 'u32[144,128]{1,0:T(1,128)}', space=vmem, size = 0x12000, scoped, tag = 'internal scratch']
  %s0 = inlined_call_operand.hbm [shape: bf16[8,128], index: 0, kind: input, shape index: {}]
  %s1 = inlined_call_operand.hbm [shape: bf16[128,128], index: 1, kind: input, shape index: {}]
  %s2 = inlined_call_operand.vmem [shape: f32[1,128], index: 2, kind: input, shape index: {}]
  %s3 = inlined_call_operand.hbm [shape: bf16[128,128], index: 3, kind: input, shape index: {}]
  %s4 = inlined_call_operand.vmem [shape: f32[1,128], index: 4, kind: input, shape index: {}]
  %s5 = inlined_call_operand.hbm [shape: bf16[128,128], index: 5, kind: input, shape index: {}]
  %s6 = inlined_call_operand.vmem [shape: f32[1,128], index: 6, kind: input, shape index: {}]
  %s7 = inlined_call_operand.hbm [shape: f32[8,128], index: 7, kind: output, shape index: {0}]
  %s8 = inlined_call_operand.hbm [shape: f32[8,128], index: 8, kind: output, shape index: {1}]
  %9 = xla_tuple %s7, %s8
  %s10 = sld [smem:[#allocation0]]
  $region62: #{tpu_custom_call.1} parent=0
    _
  %s12 = ssub.s32 1, %s10
  %s13 = scalar_select 0, %s12, %s10
  $region1: #{tpu_custom_call.1} parent=0
    #allocation2 [shape = 'u8[2048]{0}', space=vmem, size = 0x800, scoped, tag = 'input window, operand 0, single buffered']
    #allocation3 [shape = 's32[1]{0}', space=sflag, size = 0x4, scoped, tag = 'scoped memory for tpu_custom_call.1']
    #allocation4 [shape = 's32[1]{0}', space=sflag, size = 0x4, scoped, tag = 'scoped memory for tpu_custom_call.1']
    #allocation5 [shape = 'u8[32768]{0}', space=vmem, size = 0x8000, scoped, tag = 'input window, operand 1, single buffered']
    #allocation6 [shape = 's32[1]{0}', space=sflag, size = 0x4, scoped, tag = 'scoped memory for tpu_custom_call.1']
    #allocation7 [shape = 'u8[32768]{0}', space=vmem, size = 0x8000, scoped, tag = 'input window, operand 3, single buffered']
    #allocation8 [shape = 'u8[32768]{0}', space=vmem, size = 0x8000, scoped, tag = 'input window, operand 5, single buffered']
    #allocation9 [shape = 's32[1]{0}', space=sflag, size = 0x4, scoped, tag = 'scoped memory for tpu_custom_call.1']
    #allocation10 [shape = 'u8[4096]{0}', space=vmem, size = 0x1000, scoped, tag = 'output window, operand 0, single buffered']
    #allocation11 [shape = 'u8[4096]{0}', space=vmem, size = 0x1000, scoped, tag = 'output window, operand 1, single buffered']
    #allocation12 [shape = 's32[1]{0}', space=sflag, size = 0x4, scoped, tag = 'scoped memory for tpu_custom_call.1']
    %14 = vsyncpa [#allocation3], 0
    %15 = vsyncpa [#allocation6], 0
    %16 = vsyncpa [#allocation9], 0
    %17 = vsyncpa [#allocation4], 0
    %18 = vsyncpa [#allocation12], 0
    // Predicated region
    $region2: #{tpu_custom_call.1} parent=1 // pred_check
      _
    $region3: #{tpu_custom_call.1} parent=1 // pred_check_branch
      %20 = sbr.rel (0) target = $region5
    $region4: #{tpu_custom_call.1} parent=1 // pred_region
      %s22 = ssub.s32 64, 64
      %23 = vsyncadd [#allocation3], %s22
      %s25 = sshll.u32 [#allocation2], 4
      %s26 = int_to_ptr.vmem [resolvable:$true] %s25
      %28 = dma.hbm_to_vmem [thread:$0]  %s0, 64, %s26, [#allocation3]
    $region5: #{tpu_custom_call.1} parent=1 // pred_fallthru
      _
    // Predicated region
    $region6: #{tpu_custom_call.1} parent=1 // pred_check
      _
    $region7: #{tpu_custom_call.1} parent=1 // pred_check_branch
      %30 = sbr.rel (0) target = $region9
    $region8: #{tpu_custom_call.1} parent=1 // pred_region
      %s32 = ssub.s32 1024, 1024
      %33 = vsyncadd [#allocation6], %s32
      %s34 = sshll.u32 [#allocation5], 4
      %s35 = int_to_ptr.vmem [resolvable:$true] %s34
      %40 = dma.hbm_to_vmem [thread:$0]  %s1, 1024, %s35, [#allocation6], 64, 64, 4
    $region9: #{tpu_custom_call.1} parent=1 // pred_fallthru
      _
    // Predicated region
    $region10: #{tpu_custom_call.1} parent=1 // pred_check
      _
    $region11: #{tpu_custom_call.1} parent=1 // pred_check_branch
      %42 = sbr.rel (0) target = $region13
    $region12: #{tpu_custom_call.1} parent=1 // pred_region
      _
    $region13: #{tpu_custom_call.1} parent=1 // pred_fallthru
      _
    // Predicated region
    $region14: #{tpu_custom_call.1} parent=1 // pred_check
      _
    $region15: #{tpu_custom_call.1} parent=1 // pred_check_branch
      %44 = sbr.rel (0) target = $region17
    $region16: #{tpu_custom_call.1} parent=1 // pred_region
      %s46 = ssub.s32 1024, 1024
      %47 = vsyncadd [#allocation6], %s46
      %s48 = sshll.u32 [#allocation7], 4
      %s49 = int_to_ptr.vmem [resolvable:$true] %s48
      %54 = dma.hbm_to_vmem [thread:$0]  %s3, 1024, %s49, [#allocation6], 64, 64, 4
    $region17: #{tpu_custom_call.1} parent=1 // pred_fallthru
      _
    // Predicated region
    $region18: #{tpu_custom_call.1} parent=1 // pred_check
      _
    $region19: #{tpu_custom_call.1} parent=1 // pred_check_branch
      %56 = sbr.rel (0) target = $region21
    $region20: #{tpu_custom_call.1} parent=1 // pred_region
      _
    $region21: #{tpu_custom_call.1} parent=1 // pred_fallthru
      _
    // Predicated region
    $region22: #{tpu_custom_call.1} parent=1 // pred_check
      _
    $region23: #{tpu_custom_call.1} parent=1 // pred_check_branch
      %58 = sbr.rel (0) target = $region25
    $region24: #{tpu_custom_call.1} parent=1 // pred_region
      %s60 = ssub.s32 1024, 1024
      %61 = vsyncadd [#allocation9], %s60
      %s62 = sshll.u32 [#allocation8], 4
      %s63 = int_to_ptr.vmem [resolvable:$true] %s62
      %68 = dma.hbm_to_vmem [thread:$0]  %s5, 1024, %s63, [#allocation9], 64, 64, 4
    $region25: #{tpu_custom_call.1} parent=1 // pred_fallthru
      _
    // Predicated region
    $region26: #{tpu_custom_call.1} parent=1 // pred_check
      _
    $region27: #{tpu_custom_call.1} parent=1 // pred_check_branch
      %70 = sbr.rel (0) target = $region29
    $region28: #{tpu_custom_call.1} parent=1 // pred_region
      _
    $region29: #{tpu_custom_call.1} parent=1 // pred_fallthru
      _
    // Predicated region
    $region30: #{tpu_custom_call.1} parent=1 // pred_check
      _
    $region31: #{tpu_custom_call.1} parent=1 // pred_check_branch
      %72 = sbr.rel (0) target = $region33
    $region32: #{tpu_custom_call.1} parent=1 // pred_region
      %73 = dma.done [#allocation3], 64
    $region33: #{tpu_custom_call.1} parent=1 // pred_fallthru
      _
    // Predicated region
    $region34: #{tpu_custom_call.1} parent=1 // pred_check
      _
    $region35: #{tpu_custom_call.1} parent=1 // pred_check_branch
      %75 = sbr.rel (0) target = $region37
    $region36: #{tpu_custom_call.1} parent=1 // pred_region
      %76 = dma.done [#allocation6], 1024
    $region37: #{tpu_custom_call.1} parent=1 // pred_fallthru
      _
    // Predicated region
    $region38: #{tpu_custom_call.1} parent=1 // pred_check
      _
    $region39: #{tpu_custom_call.1} parent=1 // pred_check_branch
      %78 = sbr.rel (0) target = $region41
    $region40: #{tpu_custom_call.1} parent=1 // pred_region
      %79 = dma.done [#allocation6], 1024
    $region41: #{tpu_custom_call.1} parent=1 // pred_fallthru
      _
    // Predicated region
    $region42: #{tpu_custom_call.1} parent=1 // pred_check
      _
    $region43: #{tpu_custom_call.1} parent=1 // pred_check_branch
      %81 = sbr.rel (0) target = $region45
    $region44: #{tpu_custom_call.1} parent=1 // pred_region
      %82 = dma.done [#allocation9], 1024
    $region45: #{tpu_custom_call.1} parent=1 // pred_fallthru
      _
    %v84 = vld [vmem:[%s2] sm:$0x1]
    %v85 = vld [vmem:[%s4] sm:$0x1]
    %v86 = vld [vmem:[%s6] sm:$0x1]
    %v87 = vld [vmem:[#allocation2] sm:$0xf]
    %v88 = vld [vmem:[#allocation5] sm:$0xf]
    %v89 = vld [vmem:[#allocation5 + $0x4] sm:$0xf]
    %v90 = vld [vmem:[#allocation5 + $0x8] sm:$0xf]
    %v91 = vld [vmem:[#allocation5 + $0xc] sm:$0xf]
    %v92 = vld [vmem:[#allocation5 + $0x10] sm:$0xf]
    %v93 = vld [vmem:[#allocation5 + $0x14] sm:$0xf]
    %v94 = vld [vmem:[#allocation5 + $0x18] sm:$0xf]
    %v95 = vld [vmem:[#allocation5 + $0x1c] sm:$0xf]
    %v96 = vld [vmem:[#allocation5 + $0x20] sm:$0xf]
    %v97 = vld [vmem:[#allocation5 + $0x24] sm:$0xf]
    %v98 = vld [vmem:[#allocation5 + $0x28] sm:$0xf]
    %v99 = vld [vmem:[#allocation5 + $0x2c] sm:$0xf]
    %v100 = vld [vmem:[#allocation5 + $0x30] sm:$0xf]
    %v101 = vld [vmem:[#allocation5 + $0x34] sm:$0xf]
    %v102 = vld [vmem:[#allocation5 + $0x38] sm:$0xf]
    %v103 = vld [vmem:[#allocation5 + $0x3c] sm:$0xf]
    %v105 = vlaneseq
    %v106 = vshrl.u32 %v105, 7
    %v107 = vsub.s32 0, %v106
    %v108 = vrot.slane %v84, %v107
    %v126 = vunpack.c.l.b16 %v88
    %v127 = vunpack.c.l.b16 %v89
    %v128 = vunpack.c.l.b16 %v90
    %v129 = vunpack.c.l.b16 %v91
    %v130 = vunpack.c.l.b16 %v92
    %v131 = vunpack.c.l.b16 %v93
    %v132 = vunpack.c.l.b16 %v94
    %v133 = vunpack.c.l.b16 %v95
    %v134 = vunpack.c.l.b16 %v96
    %v135 = vunpack.c.l.b16 %v97
    %v136 = vunpack.c.l.b16 %v98
    %v137 = vunpack.c.l.b16 %v99
    %v138 = vunpack.c.l.b16 %v100
    %v139 = vunpack.c.l.b16 %v101
    %v140 = vunpack.c.l.b16 %v102
    %v141 = vunpack.c.l.b16 %v103
    %v142 = vpack.c.b16 %v127, %v126
    %v143 = vpack.c.b16 %v129, %v128
    %v144 = vpack.c.b16 %v131, %v130
    %v145 = vpack.c.b16 %v133, %v132
    %v146 = vpack.c.b16 %v135, %v134
    %v147 = vpack.c.b16 %v137, %v136
    %v148 = vpack.c.b16 %v139, %v138
    %v149 = vpack.c.b16 %v141, %v140
    %158 = vmatprep.subr.bf16.mxu0 0
    %159 = vmatpush1.bf16.msra.mxu0 %v149
    %160 = vmatprep.subr.bf16.mxu0 0
    %161 = vmatpush1.bf16.msra.mxu0 %v148
    %162 = vmatprep.subr.bf16.mxu0 0
    %163 = vmatpush1.bf16.msra.mxu0 %v147
    %164 = vmatprep.subr.bf16.mxu0 0
    %165 = vmatpush1.bf16.msra.mxu0 %v146
    %166 = vmatprep.subr.bf16.mxu0 0
    %167 = vmatpush1.bf16.msra.mxu0 %v145
    %168 = vmatprep.subr.bf16.mxu0 0
    %169 = vmatpush1.bf16.msra.mxu0 %v144
    %170 = vmatprep.subr.bf16.mxu0 0
    %171 = vmatpush1.bf16.msra.mxu0 %v143
    %172 = vmatprep.subr.bf16.mxu0 0
    %173 = vmatpush1.bf16.msra.mxu0 %v142
    %174 = vmatprep.subr.bf16.mxu0 0
    %175 = vmatpush2.bf16.msra.mxu0 0
    %176 = vmatprep.subr.bf16.mxu0 0
    %177 = vmatpush2.bf16.msra.mxu0 0
    %178 = vmatprep.subr.bf16.mxu0 0
    %179 = vmatpush2.bf16.msra.mxu0 0
    %180 = vmatprep.subr.bf16.mxu0 0
    %181 = vmatpush2.bf16.msra.mxu0 0
    %182 = vmatprep.subr.bf16.mxu0 0
    %183 = vmatpush2.bf16.msra.mxu0 0
    %184 = vmatprep.subr.bf16.mxu0 0
    %185 = vmatpush2.bf16.msra.mxu0 0
    %186 = vmatprep.subr.bf16.mxu0 0
    %187 = vmatpush2.bf16.msra.mxu0 0
    %188 = vmatprep.subr.bf16.mxu0 0
    %189 = vmatpush2.bf16.msra.mxu0 0
    %190 = vmatprep.mubr.bf16.mxu0 0
    %191 = vmatmul.mubr.bf16.gmra.mxu0 %v87
    %v192 = vpop.f32.mrf.mxu0
    %v193 = vadd.f32 %v108, %v192
    %v194 = vpop.f32.mrf.mxu0
    %v195 = vpop.f32.mrf.mxu0
    %v196 = vpop.f32.mrf.mxu0
    %197 = vdwg.mxu0
    %v198 = vmax.f32 %v193, 0.0
    %v199 = vpack.c.bf16 %v198, %v198
    %v200 = vld [vmem:[#allocation7] sm:$0xf]
    %v201 = vld [vmem:[#allocation7 + $0x4] sm:$0xf]
    %v202 = vld [vmem:[#allocation7 + $0x8] sm:$0xf]
    %v203 = vld [vmem:[#allocation7 + $0xc] sm:$0xf]
    %v204 = vld [vmem:[#allocation7 + $0x10] sm:$0xf]
    %v205 = vld [vmem:[#allocation7 + $0x14] sm:$0xf]
    %v206 = vld [vmem:[#allocation7 + $0x18] sm:$0xf]
    %v207 = vld [vmem:[#allocation7 + $0x1c] sm:$0xf]
    %v208 = vld [vmem:[#allocation7 + $0x20] sm:$0xf]
    %v209 = vld [vmem:[#allocation7 + $0x24] sm:$0xf]
    %v210 = vld [vmem:[#allocation7 + $0x28] sm:$0xf]
    %v211 = vld [vmem:[#allocation7 + $0x2c] sm:$0xf]
    %v212 = vld [vmem:[#allocation7 + $0x30] sm:$0xf]
    %v213 = vld [vmem:[#allocation7 + $0x34] sm:$0xf]
    %v214 = vld [vmem:[#allocation7 + $0x38] sm:$0xf]
    %v215 = vld [vmem:[#allocation7 + $0x3c] sm:$0xf]
    %v217 = vlaneseq
    %v218 = vshrl.u32 %v217, 7
    %v219 = vsub.s32 0, %v218
    %v220 = vrot.slane %v85, %v219
    %v238 = vunpack.c.l.b16 %v200
    %v239 = vunpack.c.l.b16 %v201
    %v240 = vunpack.c.l.b16 %v202
    %v241 = vunpack.c.l.b16 %v203
    %v242 = vunpack.c.l.b16 %v204
    %v243 = vunpack.c.l.b16 %v205
    %v244 = vunpack.c.l.b16 %v206
    %v245 = vunpack.c.l.b16 %v207
    %v246 = vunpack.c.l.b16 %v208
    %v247 = vunpack.c.l.b16 %v209
    %v248 = vunpack.c.l.b16 %v210
    %v249 = vunpack.c.l.b16 %v211
    %v250 = vunpack.c.l.b16 %v212
    %v251 = vunpack.c.l.b16 %v213
    %v252 = vunpack.c.l.b16 %v214
    %v253 = vunpack.c.l.b16 %v215
    %v254 = vpack.c.b16 %v239, %v238
    %v255 = vpack.c.b16 %v241, %v240
    %v256 = vpack.c.b16 %v243, %v242
    %v257 = vpack.c.b16 %v245, %v244
    %v258 = vpack.c.b16 %v247, %v246
    %v259 = vpack.c.b16 %v249, %v248
    %v260 = vpack.c.b16 %v251, %v250
    %v261 = vpack.c.b16 %v253, %v252
    %270 = vmatprep.subr.bf16.mxu0 0
    %271 = vmatpush1.bf16.msra.mxu0 %v261
    %272 = vmatprep.subr.bf16.mxu0 0
    %273 = vmatpush1.bf16.msra.mxu0 %v260
    %274 = vmatprep.subr.bf16.mxu0 0
    %275 = vmatpush1.bf16.msra.mxu0 %v259
    %276 = vmatprep.subr.bf16.mxu0 0
    %277 = vmatpush1.bf16.msra.mxu0 %v258
    %278 = vmatprep.subr.bf16.mxu0 0
    %279 = vmatpush1.bf16.msra.mxu0 %v257
    %280 = vmatprep.subr.bf16.mxu0 0
    %281 = vmatpush1.bf16.msra.mxu0 %v256
    %282 = vmatprep.subr.bf16.mxu0 0
    %283 = vmatpush1.bf16.msra.mxu0 %v255
    %284 = vmatprep.subr.bf16.mxu0 0
    %285 = vmatpush1.bf16.msra.mxu0 %v254
    %286 = vmatprep.subr.bf16.mxu0 0
    %287 = vmatpush2.bf16.msra.mxu0 0
    %288 = vmatprep.subr.bf16.mxu0 0
    %289 = vmatpush2.bf16.msra.mxu0 0
    %290 = vmatprep.subr.bf16.mxu0 0
    %291 = vmatpush2.bf16.msra.mxu0 0
    %292 = vmatprep.subr.bf16.mxu0 0
    %293 = vmatpush2.bf16.msra.mxu0 0
    %294 = vmatprep.subr.bf16.mxu0 0
    %295 = vmatpush2.bf16.msra.mxu0 0
    %296 = vmatprep.subr.bf16.mxu0 0
    %297 = vmatpush2.bf16.msra.mxu0 0
    %298 = vmatprep.subr.bf16.mxu0 0
    %299 = vmatpush2.bf16.msra.mxu0 0
    %300 = vmatprep.subr.bf16.mxu0 0
    %301 = vmatpush2.bf16.msra.mxu0 0
    %302 = vmatprep.mubr.bf16.mxu0 0
    %303 = vmatmul.mubr.bf16.gmra.mxu0 %v199
    %v304 = vpop.f32.mrf.mxu0
    %v305 = vadd.f32 %v220, %v304
    %v306 = vpop.f32.mrf.mxu0
    %v307 = vpop.f32.mrf.mxu0
    %v308 = vpop.f32.mrf.mxu0
    %309 = vdwg.mxu0
    %v310 = vmax.f32 %v305, 0.0
    %311 = vst [vmem:[#allocation10] sm:$0xff] %v310
    %v312 = vpack.c.bf16 %v310, %v310
    %v313 = vld [vmem:[#allocation8] sm:$0xf]
    %v314 = vld [vmem:[#allocation8 + $0x4] sm:$0xf]
    %v315 = vld [vmem:[#allocation8 + $0x8] sm:$0xf]
    %v316 = vld [vmem:[#allocation8 + $0xc] sm:$0xf]
    %v317 = vld [vmem:[#allocation8 + $0x10] sm:$0xf]
    %v318 = vld [vmem:[#allocation8 + $0x14] sm:$0xf]
    %v319 = vld [vmem:[#allocation8 + $0x18] sm:$0xf]
    %v320 = vld [vmem:[#allocation8 + $0x1c] sm:$0xf]
    %v321 = vld [vmem:[#allocation8 + $0x20] sm:$0xf]
    %v322 = vld [vmem:[#allocation8 + $0x24] sm:$0xf]
    %v323 = vld [vmem:[#allocation8 + $0x28] sm:$0xf]
    %v324 = vld [vmem:[#allocation8 + $0x2c] sm:$0xf]
    %v325 = vld [vmem:[#allocation8 + $0x30] sm:$0xf]
    %v326 = vld [vmem:[#allocation8 + $0x34] sm:$0xf]
    %v327 = vld [vmem:[#allocation8 + $0x38] sm:$0xf]
    %v328 = vld [vmem:[#allocation8 + $0x3c] sm:$0xf]
    %v330 = vlaneseq
    %v331 = vshrl.u32 %v330, 7
    %v332 = vsub.s32 0, %v331
    %v333 = vrot.slane %v86, %v332
    %v351 = vunpack.c.l.b16 %v313
    %v352 = vunpack.c.l.b16 %v314
    %v353 = vunpack.c.l.b16 %v315
    %v354 = vunpack.c.l.b16 %v316
    %v355 = vunpack.c.l.b16 %v317
    %v356 = vunpack.c.l.b16 %v318
    %v357 = vunpack.c.l.b16 %v319
    %v358 = vunpack.c.l.b16 %v320
    %v359 = vunpack.c.l.b16 %v321
    %v360 = vunpack.c.l.b16 %v322
    %v361 = vunpack.c.l.b16 %v323
    %v362 = vunpack.c.l.b16 %v324
    %v363 = vunpack.c.l.b16 %v325
    %v364 = vunpack.c.l.b16 %v326
    %v365 = vunpack.c.l.b16 %v327
    %v366 = vunpack.c.l.b16 %v328
    %v367 = vpack.c.b16 %v352, %v351
    %v368 = vpack.c.b16 %v354, %v353
    %v369 = vpack.c.b16 %v356, %v355
    %v370 = vpack.c.b16 %v358, %v357
    %v371 = vpack.c.b16 %v360, %v359
    %v372 = vpack.c.b16 %v362, %v361
    %v373 = vpack.c.b16 %v364, %v363
    %v374 = vpack.c.b16 %v366, %v365
    %383 = vmatprep.subr.bf16.mxu0 0
    %384 = vmatpush1.bf16.msra.mxu0 %v374
    %385 = vmatprep.subr.bf16.mxu0 0
    %386 = vmatpush1.bf16.msra.mxu0 %v373
    %387 = vmatprep.subr.bf16.mxu0 0
    %388 = vmatpush1.bf16.msra.mxu0 %v372
    %389 = vmatprep.subr.bf16.mxu0 0
    %390 = vmatpush1.bf16.msra.mxu0 %v371
    %391 = vmatprep.subr.bf16.mxu0 0
    %392 = vmatpush1.bf16.msra.mxu0 %v370
    %393 = vmatprep.subr.bf16.mxu0 0
    %394 = vmatpush1.bf16.msra.mxu0 %v369
    %395 = vmatprep.subr.bf16.mxu0 0
    %396 = vmatpush1.bf16.msra.mxu0 %v368
    %397 = vmatprep.subr.bf16.mxu0 0
    %398 = vmatpush1.bf16.msra.mxu0 %v367
    %399 = vmatprep.subr.bf16.mxu0 0
    %400 = vmatpush2.bf16.msra.mxu0 0
    %401 = vmatprep.subr.bf16.mxu0 0
    %402 = vmatpush2.bf16.msra.mxu0 0
    %403 = vmatprep.subr.bf16.mxu0 0
    %404 = vmatpush2.bf16.msra.mxu0 0
    %405 = vmatprep.subr.bf16.mxu0 0
    %406 = vmatpush2.bf16.msra.mxu0 0
    %407 = vmatprep.subr.bf16.mxu0 0
    %408 = vmatpush2.bf16.msra.mxu0 0
    %409 = vmatprep.subr.bf16.mxu0 0
    %410 = vmatpush2.bf16.msra.mxu0 0
    %411 = vmatprep.subr.bf16.mxu0 0
    %412 = vmatpush2.bf16.msra.mxu0 0
    %413 = vmatprep.subr.bf16.mxu0 0
    %414 = vmatpush2.bf16.msra.mxu0 0
    %415 = vmatprep.mubr.bf16.mxu0 0
    %416 = vmatmul.mubr.bf16.gmra.mxu0 %v312
    %v417 = vpop.f32.mrf.mxu0
    %v418 = vadd.f32 %v333, %v417
    %v419 = vpop.f32.mrf.mxu0
    %v420 = vpop.f32.mrf.mxu0
    %v421 = vpop.f32.mrf.mxu0
    %422 = vdwg.mxu0
    %423 = vst [vmem:[#allocation11] sm:$0xff] %v418
    // Predicated region
    $region46: #{tpu_custom_call.1} parent=1 // pred_check
      _
    $region47: #{tpu_custom_call.1} parent=1 // pred_check_branch
      %425 = sbr.rel (0) target = $region49
    $region48: #{tpu_custom_call.1} parent=1 // pred_region
      %s427 = ssub.s32 128, 128
      %428 = vsyncadd [#allocation4], %s427
      %s430 = sshll.u32 [#allocation10], 4
      %s431 = int_to_ptr.vmem [resolvable:$true] %s430
      %433 = dma.vmem_to_hbm [thread:$0]  %s431, 128, %s7, [#allocation4]
    $region49: #{tpu_custom_call.1} parent=1 // pred_fallthru
      _
    // Predicated region
    $region50: #{tpu_custom_call.1} parent=1 // pred_check
      _
    $region51: #{tpu_custom_call.1} parent=1 // pred_check_branch
      %435 = sbr.rel (0) target = $region53
    $region52: #{tpu_custom_call.1} parent=1 // pred_region
      %s437 = ssub.s32 128, 128
      %438 = vsyncadd [#allocation12], %s437
      %s440 = sshll.u32 [#allocation11], 4
      %s441 = int_to_ptr.vmem [resolvable:$true] %s440
      %443 = dma.vmem_to_hbm [thread:$0]  %s441, 128, %s8, [#allocation12]
    $region53: #{tpu_custom_call.1} parent=1 // pred_fallthru
      _
    // Predicated region
    $region54: #{tpu_custom_call.1} parent=1 // pred_check
      _
    $region55: #{tpu_custom_call.1} parent=1 // pred_check_branch
      %445 = sbr.rel (0) target = $region57
    $region56: #{tpu_custom_call.1} parent=1 // pred_region
      %446 = dma.done [#allocation4], 128
    $region57: #{tpu_custom_call.1} parent=1 // pred_fallthru
      _
    // Predicated region
    $region58: #{tpu_custom_call.1} parent=1 // pred_check
      _
    $region59: #{tpu_custom_call.1} parent=1 // pred_check_branch
      %448 = sbr.rel (0) target = $region61
    $region60: #{tpu_custom_call.1} parent=1 // pred_region
      %449 = dma.done [#allocation12], 128
    $region61: #{tpu_custom_call.1} parent=1 // pred_fallthru
      _
    %450 = vsyncpa [#allocation3], 1
    %451 = vsyncpa [#allocation6], 1
    %452 = vsyncpa [#allocation9], 1
    %453 = vsyncpa [#allocation4], 1
    %454 = vsyncpa [#allocation12], 1

</llo_original>
